<compile_context>
chip_gen: v7x
topology: tpu7x:2x2x1
jax: 0.10.0
libtpu: 0.0.40
codegen_flags: <defaults>
</compile_context>

<pallas_src>
import functools

import jax
import jax.numpy as jnp
from jax.experimental import pallas as pl
from jax.experimental.pallas import tpu as pltpu


_LANE_QUANTUM = 128            # lane tile: even + multiple of the 128-lane vreg width
_MAX_LANE_TILE = 64 * 1024     # cap lane tile (keeps table tiles small)
_ROW_QUANTUM = 8               # sublane width


def _vmem_capacity_bytes() -> int:
    """Physical VMEM per TensorCore; conservative fallback = v7x (64 MiB)."""
    try:
        info = pltpu.get_tpu_info()
        cap = getattr(info, "vmem_capacity_bytes", None)
        if cap:
            return int(cap)
    except Exception:
        pass
    return 64 << 20


def _largest_aligned_divisor(n: int, quantum: int, cap: int) -> int:
    """Largest d with d % quantum == 0, n % d == 0, d <= cap; 0 if none."""
    d = (min(cap, n) // quantum) * quantum
    while d >= quantum:
        if n % d == 0:
            return d
        d -= quantum
    return 0


def _choose_tiles(rows: int, lanes: int, itemsize: int, target_tile_bytes: int):
    # Lane tile: multiple of 128 (even => rotation pairs never straddle a tile
    # and tile offsets j*tl stay even => parity-masked tables line up), or the
    # full (even) extent when lanes is not 128-aligned.
    if lanes % _LANE_QUANTUM == 0:
        tl = _largest_aligned_divisor(lanes, _LANE_QUANTUM, _MAX_LANE_TILE) or lanes
    else:
        # TODO(synk): pad lanes to a multiple of 128 instead of falling back to
        # the full extent when S*D is both unaligned and very large.
        tl = lanes
    # Row tile: multiple of 8 sized so the x tile is ~target_tile_bytes.
    if rows % _ROW_QUANTUM == 0:
        want = max(_ROW_QUANTUM, target_tile_bytes // max(1, tl * itemsize))
        tr = _largest_aligned_divisor(rows, _ROW_QUANTUM, min(want, rows)) or rows
    else:
        tr = rows
    # Guarantee >= 2 grid steps when the shape allows it, so both v7x
    # TensorCores get work ("parallel" axes are megacore-sharded).
    if (lanes // tl) * (rows // tr) < 2:
        if lanes % _LANE_QUANTUM == 0 and lanes // _LANE_QUANTUM >= 2:
            tl = _largest_aligned_divisor(lanes, _LANE_QUANTUM, tl // 2) or tl
        elif rows % _ROW_QUANTUM == 0 and rows // _ROW_QUANTUM >= 2:
            tr = _largest_aligned_divisor(rows, _ROW_QUANTUM, tr // 2) or tr
    return tr, tl


def _vmem_footprint_bytes(tr: int, tl: int, itemsize: int) -> int:
    io_tiles = 2 * 2 * tr * tl * itemsize      # double-buffered x in + out
    f32_tmps = 3 * tr * tl * 4                 # upcast x / rolled neighbours
    tables = 2 * 3 * tl * 4                    # 3 double-buffered (1, TL) f32 tables
    return io_tiles + f32_tmps + tables


def _rope_kernel(x_ref, cos_ref, sin_nxt_ref, sin_prv_ref, o_ref):
    # x_ref / o_ref: (TR, TL) in the input dtype; cos/sin_* refs: (1, TL) f32.
    x_raw = x_ref[...]
    tl = x_raw.shape[-1]
    # Neighbour values along the lane axis, rolled in the *input* dtype (half
    # the XLU / temp traffic for bf16).  jnp.roll semantics:
    #   out[j] = in[(j - shift) % tl]
    # Wrapped lanes are killed by the zeros baked into the sin tables.
    x_nxt = pltpu.roll(x_raw, shift=tl - 1, axis=1)   # x_nxt[j] = x[j + 1]
    x_prv = pltpu.roll(x_raw, shift=1, axis=1)        # x_prv[j] = x[j - 1]
    out = (x_raw.astype(jnp.float32) * cos_ref[...]
           + x_nxt.astype(jnp.float32) * sin_nxt_ref[...]
           + x_prv.astype(jnp.float32) * sin_prv_ref[...])
    o_ref[...] = out.astype(o_ref.dtype)


@functools.partial(jax.jit, static_argnames=("base",))
def rope_1d(x, pos_indices, base=10000.0):
    """1D RoPE. x: [B, H, S, D]; pos_indices: [S]. Returns same shape/dtype."""
    B, H, S, D = x.shape
    assert D % 2 == 0, "head_dim must be even"

    # ---- freqs / cos / sin tables (f32), identical to the PyTorch module ----
    # Under jit these fuse into the same program; for static pos_indices XLA
    # constant-folds them (replaces the lru_cache of the PyTorch module).
    exponents = jnp.arange(0, D, 2, dtype=jnp.float32)[: D // 2] / float(D)
    inv_freq = 1.0 / (base ** exponents)                                  # (D/2,)
    freqs = pos_indices.astype(jnp.float32)[:, None] * inv_freq[None, :]  # (S, D/2)
    freqs = jnp.repeat(freqs, 2, axis=-1)                                 # (S, D)
    cos = jnp.cos(freqs)
    sin = jnp.sin(freqs)
    # Parity-masked sin tables (zeros also absorb pltpu.roll wrap-around):
    #   even lanes: out = x*cos - x[l+1]*sin  -> sin_nxt = -sin on even lanes
    #   odd  lanes: out = x*cos + x[l-1]*sin  -> sin_prv = +sin on odd lanes
    lane_is_even = (jnp.arange(D) % 2 == 0)[None, :]                      # (1, D)
    sin_nxt = jnp.where(lane_is_even, -sin, 0.0)
    sin_prv = jnp.where(lane_is_even, 0.0, sin)

    # ---- lane-dense 2-D view: rows = B*H, lanes = S*D ----
    rows, lanes = B * H, S * D
    xr = x.reshape(rows, lanes)
    cos_f = cos.reshape(1, lanes)
    sin_nxt_f = sin_nxt.reshape(1, lanes)
    sin_prv_f = sin_prv.reshape(1, lanes)

    vmem_cap = _vmem_capacity_bytes()
    target_tile_bytes = (4 << 20) if vmem_cap >= (128 << 20) else (2 << 20)
    tr, tl = _choose_tiles(rows, lanes, x.dtype.itemsize, target_tile_bytes)

    footprint = _vmem_footprint_bytes(tr, tl, x.dtype.itemsize)
    vmem_limit = min(max(32 << 20, (footprint * 3) // 2), (vmem_cap * 7) // 8)

    # Lane tiles OUTER (slow), row tiles INNER (fast): the table block index
    # is constant across the whole inner row sweep, so Pallas keeps the three
    # (1, TL) tables resident in VMEM instead of re-DMAing them every step.
    grid = (lanes // tl, rows // tr)
    x_spec = pl.BlockSpec((tr, tl), lambda j, i: (i, j))
    out_spec = pl.BlockSpec((tr, tl), lambda j, i: (i, j))
    tbl_spec = pl.BlockSpec((1, tl), lambda j, i: (0, j))

    out = pl.pallas_call(
        _rope_kernel,
        out_shape=jax.ShapeDtypeStruct((rows, lanes), x.dtype),
        grid_spec=pltpu.PrefetchScalarGridSpec(
            num_scalar_prefetch=0,
            grid=grid,
            in_specs=[x_spec, tbl_spec, tbl_spec, tbl_spec],
            out_specs=out_spec,
        ),
        compiler_params=pltpu.CompilerParams(
            dimension_semantics=("parallel", "parallel"),
            vmem_limit_bytes=int(vmem_limit),
        ),
        # NOTE: input_output_aliases={0: 0} would run RoPE in place on x and
        # drop the separate output allocation, but it donates x (caller-visible
        # change), so we keep out-of-place semantics like the PyTorch module.
    )(xr, cos_f, sin_nxt_f, sin_prv_f)

    return out.reshape(B, H, S, D)


def _rope_1d_ref(x, pos_indices, base=10000.0):
    """Pure-JAX reference mirroring the PyTorch forward exactly."""
    B, H, S, D = x.shape
    exponents = jnp.arange(0, D, 2, dtype=jnp.float32)[: D // 2] / float(D)
    inv_freq = 1.0 / (base ** exponents)
    freqs = pos_indices.astype(jnp.float32)[:, None] * inv_freq[None, :]
    freqs = jnp.repeat(freqs, 2, axis=-1)
    cos = jnp.cos(freqs)[None, None]
    sin = jnp.sin(freqs)[None, None]

    xf = x.astype(jnp.float32)
    xp = xf.reshape(B, H, S, D // 2, 2)
    x1, x2 = xp[..., 0], xp[..., 1]
    rot = jnp.stack([-x2, x1], axis=-1).reshape(B, H, S, D)
    return (xf * cos + rot * sin).astype(x.dtype)


if __name__ == "__main__":
    key = jax.random.PRNGKey(0)
    B, H, S, D = 2, 4, 8, 32
    x = jax.random.normal(key, (B, H, S, D), dtype=jnp.float32)
    pos_indices = jnp.arange(S, dtype=jnp.int32)

    out = jax.block_until_ready(rope_1d(x, pos_indices))
    ref = _rope_1d_ref(x, pos_indices)

    assert out.shape == x.shape and out.dtype == x.dtype
    assert jnp.allclose(out, ref, atol=1e-5, rtol=1e-5), float(
        jnp.max(jnp.abs(out - ref)))
    print("KERNEL_OK")
</pallas_src>

<mosaic_0001>
module attributes {stable_mosaic.version = 11 : i64} {
  func.func @_rope_kernel(%arg0: i32, %arg1: i32, %arg2: memref<8x128xf32, #tpu.memory_space<vmem>>, %arg3: memref<1x128xf32, #tpu.memory_space<vmem>>, %arg4: memref<1x128xf32, #tpu.memory_space<vmem>>, %arg5: memref<1x128xf32, #tpu.memory_space<vmem>>, %arg6: memref<8x128xf32, #tpu.memory_space<vmem>>) attributes {dimension_semantics = [#tpu.dimension_semantics<parallel>, #tpu.dimension_semantics<parallel>], iteration_bounds = array<i64: 2, 1>, scalar_prefetch = 0 : i64, scratch_operands = 0 : i64, tpu.core_type = #tpu.core_type<tc>, window_params = [{transform_indices = @transform_0, window_bounds = array<i64: 8, 128>}, {transform_indices = @transform_1, window_bounds = array<i64: 1, 128>}, {transform_indices = @transform_2, window_bounds = array<i64: 1, 128>}, {transform_indices = @transform_3, window_bounds = array<i64: 1, 128>}, {transform_indices = @transform_4, window_bounds = array<i64: 8, 128>}]} {
    %c0 = arith.constant 0 : index
    %c0_0 = arith.constant 0 : index
    %0 = vector.load %arg2[%c0, %c0_0] : memref<8x128xf32, #tpu.memory_space<vmem>>, vector<8x128xf32>
    %c127_i32 = arith.constant 127 : i32
    %1 = tpu.dynamic_rotate %0 by %c127_i32 dim 1 : vector<8x128xf32>, i32 -> vector<8x128xf32>
    %c1_i32 = arith.constant 1 : i32
    %2 = tpu.dynamic_rotate %0 by %c1_i32 dim 1 : vector<8x128xf32>, i32 -> vector<8x128xf32>
    %c0_1 = arith.constant 0 : index
    %c0_2 = arith.constant 0 : index
    %3 = vector.load %arg3[%c0_1, %c0_2] : memref<1x128xf32, #tpu.memory_space<vmem>>, vector<1x128xf32>
    %4 = vector.broadcast %3 : vector<1x128xf32> to vector<8x128xf32>
    %5 = arith.mulf %0, %4 : vector<8x128xf32>
    %c0_3 = arith.constant 0 : index
    %c0_4 = arith.constant 0 : index
    %6 = vector.load %arg4[%c0_3, %c0_4] : memref<1x128xf32, #tpu.memory_space<vmem>>, vector<1x128xf32>
    %7 = vector.broadcast %6 : vector<1x128xf32> to vector<8x128xf32>
    %8 = arith.mulf %1, %7 : vector<8x128xf32>
    %9 = arith.addf %5, %8 : vector<8x128xf32>
    %c0_5 = arith.constant 0 : index
    %c0_6 = arith.constant 0 : index
    %10 = vector.load %arg5[%c0_5, %c0_6] : memref<1x128xf32, #tpu.memory_space<vmem>>, vector<1x128xf32>
    %11 = vector.broadcast %10 : vector<1x128xf32> to vector<8x128xf32>
    %12 = arith.mulf %2, %11 : vector<8x128xf32>
    %13 = arith.addf %9, %12 : vector<8x128xf32>
    %c0_7 = arith.constant 0 : index
    %c0_8 = arith.constant 0 : index
    %14 = vector.load %arg6[%c0_7, %c0_8] : memref<8x128xf32, #tpu.memory_space<vmem>>, vector<8x128xf32>
    tpu.vector_store %arg6[%c0_7, %c0_8], %13 {strides = array<i32>} : memref<8x128xf32, #tpu.memory_space<vmem>>, vector<8x128xf32>,
    return
  }
  func.func @transform_0(%arg0: i32, %arg1: i32) -> (i32, i32) {
    %c0_i32 = arith.constant 0 : i32
    return %arg1, %arg0 : i32, i32
  }
  func.func @transform_1(%arg0: i32, %arg1: i32) -> (i32, i32) {
    %c0_i32 = arith.constant 0 : i32
    %c0_i32_0 = arith.constant 0 : i32
    return %c0_i32, %arg0 : i32, i32
  }
  func.func @transform_2(%arg0: i32, %arg1: i32) -> (i32, i32) {
    %c0_i32 = arith.constant 0 : i32
    %c0_i32_0 = arith.constant 0 : i32
    return %c0_i32, %arg0 : i32, i32
  }
  func.func @transform_3(%arg0: i32, %arg1: i32) -> (i32, i32) {
    %c0_i32 = arith.constant 0 : i32
    %c0_i32_0 = arith.constant 0 : i32
    return %c0_i32, %arg0 : i32, i32
  }
  func.func @transform_4(%arg0: i32, %arg1: i32) -> (i32, i32) {
    %c0_i32 = arith.constant 0 : i32
    return %arg1, %arg0 : i32, i32
  }
}

</mosaic_0001>

<llo_original>
// kernel: rope_1d.1
$region0: #{rope_1d.1}
  #allocation0 [shape = 'u32[]', space=smem, size = 0x4, offset = 0x4, fixed_abs, tag = 'smem constant byte address 0x4 - core index']
  #allocation1 [shape = 'u32[144,128]{1,0:T(1,128)}', space=vmem, size = 0x12000, scoped, tag = 'internal scratch']
  %s0 = inlined_call_operand.vmem [shape: f32[8,256], index: 0, kind: input, shape index: {}]
  %s1 = inlined_call_operand.vmem [shape: f32[1,256], index: 1, kind: input, shape index: {}]
  %s2 = inlined_call_operand.vmem [shape: f32[1,256], index: 2, kind: input, shape index: {}]
  %s3 = inlined_call_operand.vmem [shape: f32[1,256], index: 3, kind: input, shape index: {}]
  %s4 = inlined_call_operand.vmem [shape: f32[8,256], index: 4, kind: output, shape index: {}]
  %s5 = sld [smem:[#allocation0]]
  $region49: #{rope_1d.1} parent=0
    _
  %s7 = ssub.s32 1, %s5
  %s8 = scalar_select 0, %s7, %s5
  loop: start=0, step=1, limit=4
  $region2: #{rope_1d.1} parent=0 // loop_pre_header
    _
  $region3: #{rope_1d.1} parent=0 // loop_header
    %s10 = sphi 0, %s14
    %p11 = scmp.ge.s32.totalorder %s10, 4
    %s17 = sphi 0, %s29
    %s18 = sphi 0, %s25
    %s19 = sphi 0, %s17
    %s20 = sphi 0, %s18
    %s21 = sphi 0, %s19
    %s22 = sphi 0, %s20
    %s34 = sphi 0, %s36
    %s37 = sphi 0, %s34
    %s38 = sphi 0, %s37
    %s54 = sphi 0, %s38
    %s60 = sphi 0, %s62
    %s63 = sphi 0, %s60
    %s64 = sphi 0, %s63
    %s80 = sphi 0, %s64
    %s86 = sphi 0, %s88
    %s89 = sphi 0, %s86
    %s90 = sphi 0, %s89
    %s106 = sphi 0, %s90
    %s112 = sphi 0, %s114
    %s115 = sphi 0, %s112
    %s116 = sphi 0, %s115
    %s132 = sphi 0, %s116
    %s140 = sphi 0, %s142
    %s143 = sphi 0, %s140
    %s144 = sphi 0, %s143
    %s160 = sphi 0, %s144
  $region4: #{rope_1d.1} parent=0 // loop_header_branch
    %13 = sbr.rel (%p11) target = $region8
  $region5: #{rope_1d.1} parent=0 // loop_body
    %s15 = ssub.s32 %s10, 1
    %s16 = ssub.s32 %s10, 2
    %s23 = sadd.s32 1, %s18
    %p24 = scmp.ge.s32.totalorder %s23, 1
    %s25 = scalar_select %p24, 0, %s23
    %s26 = sadd.s32 1, %s17
    %s27 = scalar_select %p24, %s26, %s17
    %p28 = scmp.ge.s32.totalorder %s27, 2
    %s29 = scalar_select %p28, 0, %s27
    %s30 = ssub.s32 %s18, %s25
    %s31 = ssub.s32 %s17, %s29
    %s32 = sor.u32 %s30, %s31
    %p33 = scmp.eq.s32.totalorder %s32, 0
    %s35 = sadd.s32 %s34, 1
    %s36 = scalar_select %p33, %s34, %s35
    %p39 = pneg %p33
    %p40 = scmp.eq.s32.totalorder %s10, 1
    %p41 = por %p39, %p40
    %p42 = scmp.ne.s32.totalorder %s34, %s37
    %p43 = scmp.eq.s32.totalorder %s10, 0
    %p44 = por %p42, %p43
    %p45 = scmp.ne.s32.totalorder %s34, %s37
    %p46 = scmp.eq.s32.totalorder %s15, 1
    %p47 = por %p45, %p46
    %p48 = scmp.ne.s32.totalorder %s37, %s38
    %p49 = scmp.eq.s32.totalorder %s15, 0
    %p50 = por %p48, %p49
    %p51 = scmp.ne.s32.totalorder %s37, %s38
    %p52 = scmp.eq.s32.totalorder %s16, 1
    %p53 = por %p51, %p52
    %p55 = scmp.ne.s32.totalorder %s38, %s54
    %p56 = scmp.eq.s32.totalorder %s16, 0
    %p57 = por %p55, %p56
    %s58 = ssub.s32 %s17, %s29
    %p59 = scmp.eq.s32.totalorder %s58, 0
    %s61 = sadd.s32 %s60, 1
    %s62 = scalar_select %p59, %s60, %s61
    %p65 = pneg %p59
    %p66 = scmp.eq.s32.totalorder %s10, 1
    %p67 = por %p65, %p66
    %p68 = scmp.ne.s32.totalorder %s60, %s63
    %p69 = scmp.eq.s32.totalorder %s10, 0
    %p70 = por %p68, %p69
    %p71 = scmp.ne.s32.totalorder %s60, %s63
    %p72 = scmp.eq.s32.totalorder %s15, 1
    %p73 = por %p71, %p72
    %p74 = scmp.ne.s32.totalorder %s63, %s64
    %p75 = scmp.eq.s32.totalorder %s15, 0
    %p76 = por %p74, %p75
    %p77 = scmp.ne.s32.totalorder %s63, %s64
    %p78 = scmp.eq.s32.totalorder %s16, 1
    %p79 = por %p77, %p78
    %p81 = scmp.ne.s32.totalorder %s64, %s80
    %p82 = scmp.eq.s32.totalorder %s16, 0
    %p83 = por %p81, %p82
    %s84 = ssub.s32 %s17, %s29
    %p85 = scmp.eq.s32.totalorder %s84, 0
    %s87 = sadd.s32 %s86, 1
    %s88 = scalar_select %p85, %s86, %s87
    %p91 = pneg %p85
    %p92 = scmp.eq.s32.totalorder %s10, 1
    %p93 = por %p91, %p92
    %p94 = scmp.ne.s32.totalorder %s86, %s89
    %p95 = scmp.eq.s32.totalorder %s10, 0
    %p96 = por %p94, %p95
    %p97 = scmp.ne.s32.totalorder %s86, %s89
    %p98 = scmp.eq.s32.totalorder %s15, 1
    %p99 = por %p97, %p98
    %p100 = scmp.ne.s32.totalorder %s89, %s90
    %p101 = scmp.eq.s32.totalorder %s15, 0
    %p102 = por %p100, %p101
    %p103 = scmp.ne.s32.totalorder %s89, %s90
    %p104 = scmp.eq.s32.totalorder %s16, 1
    %p105 = por %p103, %p104
    %p107 = scmp.ne.s32.totalorder %s90, %s106
    %p108 = scmp.eq.s32.totalorder %s16, 0
    %p109 = por %p107, %p108
    %s110 = ssub.s32 %s17, %s29
    %p111 = scmp.eq.s32.totalorder %s110, 0
    %s113 = sadd.s32 %s112, 1
    %s114 = scalar_select %p111, %s112, %s113
    %p117 = pneg %p111
    %p118 = scmp.eq.s32.totalorder %s10, 1
    %p119 = por %p117, %p118
    %p120 = scmp.ne.s32.totalorder %s112, %s115
    %p121 = scmp.eq.s32.totalorder %s10, 0
    %p122 = por %p120, %p121
    %p123 = scmp.ne.s32.totalorder %s112, %s115
    %p124 = scmp.eq.s32.totalorder %s15, 1
    %p125 = por %p123, %p124
    %p126 = scmp.ne.s32.totalorder %s115, %s116
    %p127 = scmp.eq.s32.totalorder %s15, 0
    %p128 = por %p126, %p127
    %p129 = scmp.ne.s32.totalorder %s115, %s116
    %p130 = scmp.eq.s32.totalorder %s16, 1
    %p131 = por %p129, %p130
    %p133 = scmp.ne.s32.totalorder %s116, %s132
    %p134 = scmp.eq.s32.totalorder %s16, 0
    %p135 = por %p133, %p134
    %s136 = ssub.s32 %s18, %s25
    %s137 = ssub.s32 %s17, %s29
    %s138 = sor.u32 %s136, %s137
    %p139 = scmp.eq.s32.totalorder %s138, 0
    %s141 = sadd.s32 %s140, 1
    %s142 = scalar_select %p139, %s140, %s141
    %p145 = pneg %p139
    %p146 = scmp.eq.s32.totalorder %s10, 1
    %p147 = por %p145, %p146
    %p148 = scmp.ne.s32.totalorder %s140, %s143
    %p149 = scmp.eq.s32.totalorder %s10, 0
    %p150 = por %p148, %p149
    %p151 = scmp.ne.s32.totalorder %s140, %s143
    %p152 = scmp.eq.s32.totalorder %s15, 1
    %p153 = por %p151, %p152
    %p154 = scmp.ne.s32.totalorder %s143, %s144
    %p155 = scmp.eq.s32.totalorder %s15, 0
    %p156 = por %p154, %p155
    %p157 = scmp.ne.s32.totalorder %s143, %s144
    %p158 = scmp.eq.s32.totalorder %s16, 1
    %p159 = por %p157, %p158
    %p161 = scmp.ne.s32.totalorder %s144, %s160
    %p162 = scmp.eq.s32.totalorder %s16, 0
    %p163 = por %p161, %p162
    %p164 = scmp.le.s32.totalorder 1, %s10
    %p165 = scmp.lt.s32.totalorder %s10, 3
    %p166 = pnand %p164, %p165
    %p167 = pneg %p166
    // Predicated region
    $region9: #{rope_1d.1} parent=5 // pred_check
      _
    $region10: #{rope_1d.1} parent=5 // pred_check_branch
      %169 = sbr.rel (%p166) target = $region12
    $region11: #{rope_1d.1} parent=5 // pred_region
      %s170 = ssub.s32 %s10, 1
    $region12: #{rope_1d.1} parent=5 // pred_fallthru
      _
    %p171 = scmp.lt.s32.totalorder %s10, 2
    // Predicated region
    $region13: #{rope_1d.1} parent=5 // pred_check
      %p172 = pneg %p171
    $region14: #{rope_1d.1} parent=5 // pred_check_branch
      %174 = sbr.rel (%p172) target = $region16
    $region15: #{rope_1d.1} parent=5 // pred_region
      // Predicated region
      $region17: #{rope_1d.1} parent=15 // pred_check
        %p175 = pneg %p44
      $region18: #{rope_1d.1} parent=15 // pred_check_branch
        %177 = sbr.rel (%p175) target = $region20
      $region19: #{rope_1d.1} parent=15 // pred_region
        %p178 = scmp.lt.s32.totalorder %s18, 0
        %s179 = scalar_select %p178, %s18, 0
        %p180 = scmp.lt.s32.totalorder %s17, 1
        %s181 = scalar_select %p180, %s17, 1
        %s182 = smul.addr %s179, 2
        %s183 = sadd.s32 %s181, %s182
        %s184 = smul.addr %s183, 8
        %s185 = scalar_lea.vmem %s0, %s184
      $region20: #{rope_1d.1} parent=15 // pred_fallthru
        _
      // Predicated region
      $region21: #{rope_1d.1} parent=15 // pred_check
        %p186 = pneg %p70
      $region22: #{rope_1d.1} parent=15 // pred_check_branch
        %188 = sbr.rel (%p186) target = $region24
      $region23: #{rope_1d.1} parent=15 // pred_region
        %p189 = scmp.lt.s32.totalorder %s17, 1
        %s190 = scalar_select %p189, %s17, 1
        %s191 = scalar_lea.vmem %s1, %s190
      $region24: #{rope_1d.1} parent=15 // pred_fallthru
        _
      // Predicated region
      $region25: #{rope_1d.1} parent=15 // pred_check
        %p192 = pneg %p96
      $region26: #{rope_1d.1} parent=15 // pred_check_branch
        %194 = sbr.rel (%p192) target = $region28
      $region27: #{rope_1d.1} parent=15 // pred_region
        %p195 = scmp.lt.s32.totalorder %s17, 1
        %s196 = scalar_select %p195, %s17, 1
        %s197 = scalar_lea.vmem %s2, %s196
      $region28: #{rope_1d.1} parent=15 // pred_fallthru
        _
      // Predicated region
      $region29: #{rope_1d.1} parent=15 // pred_check
        %p198 = pneg %p122
      $region30: #{rope_1d.1} parent=15 // pred_check_branch
        %200 = sbr.rel (%p198) target = $region32
      $region31: #{rope_1d.1} parent=15 // pred_region
        %p201 = scmp.lt.s32.totalorder %s17, 1
        %s202 = scalar_select %p201, %s17, 1
        %s203 = scalar_lea.vmem %s3, %s202
      $region32: #{rope_1d.1} parent=15 // pred_fallthru
        _
    $region16: #{rope_1d.1} parent=5 // pred_fallthru
      _
    %p204 = scmp.le.s32.totalorder 1, %s10
    %p205 = scmp.lt.s32.totalorder %s10, 3
    %p206 = pnand %p204, %p205
    %p207 = pneg %p206
    // Predicated region
    $region33: #{rope_1d.1} parent=5 // pred_check
      _
    $region34: #{rope_1d.1} parent=5 // pred_check_branch
      %209 = sbr.rel (%p206) target = $region36
    $region35: #{rope_1d.1} parent=5 // pred_region
      %s210 = ssub.s32 %s10, 1
      %p211 = scmp.lt.s32.totalorder %s20, 0
      %s212 = scalar_select %p211, %s20, 0
      %p213 = scmp.lt.s32.totalorder %s19, 1
      %s214 = scalar_select %p213, %s19, 1
      %s215 = smul.addr %s212, 2
      %s216 = sadd.s32 %s214, %s215
      %s217 = smul.addr %s216, 8
      %s218 = scalar_lea.vmem %s0, %s217
      %p219 = pneg %p50
      %p220 = pneg %p47
      %p221 = scmp.lt.s32.totalorder %s19, 1
      %s222 = scalar_select %p221, %s19, 1
      %s223 = scalar_lea.vmem %s1, %s222
      %p224 = pneg %p76
      %p225 = pneg %p73
      %p226 = scmp.lt.s32.totalorder %s19, 1
      %s227 = scalar_select %p226, %s19, 1
      %s228 = scalar_lea.vmem %s2, %s227
      %p229 = pneg %p102
      %p230 = pneg %p99
      %p231 = scmp.lt.s32.totalorder %s19, 1
      %s232 = scalar_select %p231, %s19, 1
      %s233 = scalar_lea.vmem %s3, %s232
      %p234 = pneg %p128
      %p235 = pneg %p125
      %p236 = pneg %p156
      %p237 = pneg %p153
      %p238 = scmp.lt.s32.totalorder %s20, 0
      %s239 = scalar_select %p238, %s20, 0
      %p240 = scmp.lt.s32.totalorder %s19, 1
      %s241 = scalar_select %p240, %s19, 1
      %s242 = smul.addr %s239, 2
      %s243 = sadd.s32 %s241, %s242
      %s244 = smul.addr %s243, 8
      %s245 = scalar_lea.vmem %s4, %s244
      %p246 = scmp.lt.s32.totalorder %s20, 0
      %s247 = scalar_select %p246, %s20, 0
      %p248 = scmp.lt.s32.totalorder %s19, 1
      %s249 = scalar_select %p248, %s19, 1
      %s250 = smul.addr %s247, 2
      %s251 = sadd.s32 %s249, %s250
      %s252 = smul.addr %s251, 8
      %s253 = scalar_lea.vmem %s0, %s252
      %p254 = scmp.lt.s32.totalorder %s19, 1
      %s255 = scalar_select %p254, %s19, 1
      %s256 = scalar_lea.vmem %s1, %s255
      %p257 = scmp.lt.s32.totalorder %s19, 1
      %s258 = scalar_select %p257, %s19, 1
      %s259 = scalar_lea.vmem %s2, %s258
      %p260 = scmp.lt.s32.totalorder %s19, 1
      %s261 = scalar_select %p260, %s19, 1
      %s262 = scalar_lea.vmem %s3, %s261
      %p263 = scmp.lt.s32.totalorder %s20, 0
      %s264 = scalar_select %p263, %s20, 0
      %p265 = scmp.lt.s32.totalorder %s19, 1
      %s266 = scalar_select %p265, %s19, 1
      %s267 = smul.addr %s264, 2
      %s268 = sadd.s32 %s266, %s267
      %s269 = smul.addr %s268, 8
      %s270 = scalar_lea.vmem %s4, %s269
      %v271 = vld [vmem:[%s253] sm:$0xff]
      %272 = vrot.lane.b32.xlu0 %v271, 127
      %v273 = vpop.permute.xlu0 %272
      %274 = vrot.lane.b32.xlu0 %v271, 1
      %v275 = vpop.permute.xlu0 %274
      %v276 = vld [vmem:[%s256] sm:$0x1]
      %v278 = vlaneseq
      %v279 = vshrl.u32 %v278, 7
      %v280 = vsub.s32 0, %v279
      %v281 = vrot.slane %v276, %v280
      %v283 = vmul.f32 %v271, %v281
      %v284 = vld [vmem:[%s259] sm:$0x1]
      %v286 = vlaneseq
      %v287 = vshrl.u32 %v286, 7
      %v288 = vsub.s32 0, %v287
      %v289 = vrot.slane %v284, %v288
      %v291 = vmul.f32 %v273, %v289
      %v292 = vadd.f32 %v283, %v291
      %v293 = vld [vmem:[%s262] sm:$0x1]
      %v295 = vlaneseq
      %v296 = vshrl.u32 %v295, 7
      %v297 = vsub.s32 0, %v296
      %v298 = vrot.slane %v293, %v297
      %v300 = vmul.f32 %v275, %v298
      %v301 = vadd.f32 %v292, %v300
      %302 = vst [vmem:[%s270] sm:$0xff] %v301
      %p303 = scmp.lt.s32.totalorder %s20, 0
      %s304 = scalar_select %p303, %s20, 0
      %p305 = scmp.lt.s32.totalorder %s19, 1
      %s306 = scalar_select %p305, %s19, 1
      %s307 = smul.addr %s304, 2
      %s308 = sadd.s32 %s306, %s307
      %s309 = smul.addr %s308, 8
      %s310 = scalar_lea.vmem %s4, %s309
      // Predicated region
      $region37: #{rope_1d.1} parent=35 // pred_check
        %p311 = pneg %p153
      $region38: #{rope_1d.1} parent=35 // pred_check_branch
        %313 = sbr.rel (%p311) target = $region40
      $region39: #{rope_1d.1} parent=35 // pred_region
        _
      $region40: #{rope_1d.1} parent=35 // pred_fallthru
        _
    $region36: #{rope_1d.1} parent=5 // pred_fallthru
      _
    %p314 = scmp.le.s32.totalorder 2, %s10
    // Predicated region
    $region41: #{rope_1d.1} parent=5 // pred_check
      %p315 = pneg %p314
    $region42: #{rope_1d.1} parent=5 // pred_check_branch
      %317 = sbr.rel (%p315) target = $region44
    $region43: #{rope_1d.1} parent=5 // pred_region
      %s318 = ssub.s32 %s10, 2
      // Predicated region
      $region45: #{rope_1d.1} parent=43 // pred_check
        %p319 = pneg %p159
      $region46: #{rope_1d.1} parent=43 // pred_check_branch
        %321 = sbr.rel (%p319) target = $region48
      $region47: #{rope_1d.1} parent=43 // pred_region
        %p322 = scmp.lt.s32.totalorder %s22, 0
        %s323 = scalar_select %p322, %s22, 0
        %p324 = scmp.lt.s32.totalorder %s21, 1
        %s325 = scalar_select %p324, %s21, 1
        %s326 = smul.addr %s323, 2
        %s327 = sadd.s32 %s325, %s326
        %s328 = smul.addr %s327, 8
        %s329 = scalar_lea.vmem %s4, %s328
      $region48: #{rope_1d.1} parent=43 // pred_fallthru
        _
    $region44: #{rope_1d.1} parent=5 // pred_fallthru
      _
  $region6: #{rope_1d.1} parent=0 // loop_footer
    %s14 = sadd.s32 1, %s10
  $region7: #{rope_1d.1} parent=0 // loop_footer_branch
    %9 = sbr.rel target = $region3
  $region8: #{rope_1d.1} parent=0 // loop_exit
    _

</llo_original>
